<compile_context>
chip_gen: v7x
topology: tpu7x:2x2x1
jax: 0.10.0
libtpu: 0.0.40
codegen_flags: <defaults>
</compile_context>

<pallas_src>
import itertools

import numpy as np
import jax
import jax.numpy as jnp
from jax import lax
from jax.experimental import pallas as pl
from jax.experimental.pallas import tpu as pltpu

IOU = 1
RI = 2


def _confusion_kernel(nvalid_ref, segm_ref, mask_ref, conf_ref, nmax_ref):
    # nvalid_ref: (1,)           int32 SMEM (scalar prefetch): # of valid points.
    # segm_ref  : (1, 1, TN)     int32 GT labels, lane-dense over points.
    # mask_ref  : (1, K, TN)     f32   soft cluster scores, lane-dense over points.
    # conf_ref  : (1, 1, KP, KP) f32   confusion counts (gt x pred); resident
    #                                  across the reduction (tile) axis.
    # nmax_ref  : (1, 1, 1, 1)   int32 running max GT label for this (b, split).
    s = pl.program_id(1)
    t = pl.program_id(2)
    tiles_per_split = pl.num_programs(2)
    tn = segm_ref.shape[-1]
    kp = conf_ref.shape[-1]
    k = mask_ref.shape[1]

    @pl.when(t == 0)
    def _init():
        conf_ref[0, 0] = jnp.zeros((kp, kp), jnp.float32)
        nmax_ref[0, 0] = jnp.full((1, 1), -1, jnp.int32)

    # Validity applied once to the (1, TN) label row: tail / out-of-range points
    # get label -1, so they match no one-hot row and contribute nothing to the
    # counts nor to the running label max.
    base = (s * tiles_per_split + t) * tn
    n_iota = lax.broadcasted_iota(jnp.int32, (1, tn), 1) + base
    seg = jnp.where(n_iota < nvalid_ref[0], segm_ref[0], -1)             # (1, TN)

    # First-max argmax over the K score rows: unrolled VPU compare/select on
    # lane-dense (1, TN) rows (strict '>' keeps the torch/numpy first-max tie
    # rule; pred is always a valid column in [0, K)).
    # TODO(synk): all-NaN score rows pick column 0 rather than the NaN position.
    best = mask_ref[0, 0:1, :]                                           # (1, TN)
    pred = jnp.zeros((1, tn), jnp.int32)
    for kk in range(1, k):
        row = mask_ref[0, kk:kk + 1, :]
        take = row > best
        best = jnp.where(take, row, best)
        pred = jnp.where(take, kk, pred)

    # One-hots in (KP, TN) orientation from minimal-shape iotas.  bf16 is exact
    # for 0/1 and the MXU accumulates in f32.
    lbl = lax.broadcasted_iota(jnp.int32, (kp, 1), 0)                    # (KP, 1)
    gt_t = (lbl == seg).astype(jnp.bfloat16)                             # (KP, TN)
    pd_t = (lbl == pred).astype(jnp.bfloat16)                            # (KP, TN)

    # matching[g, p] = sum_n gt[g, n] * pred[p, n]  (contract the shared TN axis).
    matching = lax.dot_general(gt_t, pd_t, (((1,), (1,)), ((), ())),
                               preferred_element_type=jnp.float32)       # (KP, KP)

    conf_ref[0, 0] += matching
    nmax_ref[0, 0] = jnp.maximum(nmax_ref[0, 0],
                                 jnp.max(seg, axis=-1, keepdims=True))


def _vmem_capacity_bytes():
    try:
        cap = int(getattr(pltpu.get_tpu_info(), "vmem_capacity_bytes", 0))
        if cap > 0:
            return cap
    except Exception:
        pass
    return 64 * 1024 * 1024        # conservative default (v7x physical per-TC)


def _pick_tiling(n_points, k, kp, tile_cap=None):
    """Generation-aware point-tile size and VMEM limit."""
    cap = _vmem_capacity_bytes()
    budget = min(cap // 2, 48 * 1024 * 1024)   # leave headroom for compiler temps
    k_sub = ((max(int(k), 1) + 7) // 8) * 8
    # Per-point VMEM bytes: double-buffered mask/segm input tiles (sublane
    # padded) plus in-kernel (KP, TN) broadcast / one-hot temporaries.
    per_point = 2 * k_sub * 4 + 2 * 8 * 4 + kp * (4 + 4 + 2 + 2 + 1 + 1)
    fixed = 2 * kp * kp * 4 + (1 << 20)
    tn = max(128, (budget - fixed) // per_point)
    tn = min(8192, (tn // 128) * 128)
    if tile_cap is not None:
        tn = min(tn, max(128, (int(tile_cap) // 128) * 128))
    n_cap = ((int(n_points) + 127) // 128) * 128
    tn = max(128, min(tn, n_cap))
    est = fixed + per_point * tn
    vmem_limit = int(min(cap - (2 << 20), max(2 * est, 32 << 20)))
    vmem_limit = max(vmem_limit, est + (4 << 20))
    return int(tn), int(vmem_limit)


def _pallas_confusion(segm_p, mask_kn, n_valid, kp, tn, n_split, tiles_per_split,
                      vmem_limit):
    B, K, _ = mask_kn.shape
    nval = jnp.asarray([n_valid], dtype=jnp.int32)
    pt_map = lambda b, s, t, nv: (b, 0, s * tiles_per_split + t)
    out_map = lambda b, s, t, nv: (b, s, 0, 0)
    return pl.pallas_call(
        _confusion_kernel,
        out_shape=(jax.ShapeDtypeStruct((B, n_split, kp, kp), jnp.float32),
                   jax.ShapeDtypeStruct((B, n_split, 1, 1), jnp.int32)),
        grid_spec=pltpu.PrefetchScalarGridSpec(
            num_scalar_prefetch=1,
            grid=(B, n_split, tiles_per_split),
            in_specs=[pl.BlockSpec((1, 1, tn), pt_map),
                      pl.BlockSpec((1, K, tn), pt_map)],
            out_specs=(pl.BlockSpec((1, 1, kp, kp), out_map),
                       pl.BlockSpec((1, 1, 1, 1), out_map))),
        compiler_params=pltpu.CompilerParams(
            dimension_semantics=("parallel", "parallel", "arbitrary"),
            vmem_limit_bytes=vmem_limit),
    )(nval, segm_p, mask_kn)


def _linear_sum_assignment_max(cost):
    """Max-sum assignment on host: scipy Hungarian if available, else brute force."""
    try:
        from scipy.optimize import linear_sum_assignment
        return linear_sum_assignment(cost, maximize=True)
    except Exception:
        pass
    # TODO(synk): Hungarian matching is a sequential host algorithm with no clean
    # Pallas equivalent; the brute-force fallback is only OK for small K.
    r, c = cost.shape
    assert r <= c
    best_sum, best_cols = -np.inf, None
    rows = np.arange(r)
    for perm in itertools.permutations(range(c), r):
        s = cost[rows, list(perm)].sum()
        if s > best_sum:
            best_sum, best_cols = s, np.array(perm)
    return rows, best_cols


def clustering_metrics(mask, segm, spec=(IOU, RI), ignore_npoint_thresh=0,
                       _tile_cap=None):
    """mask: (B, ..., K) float scores; segm: (B, ...) integer GT labels from 0."""
    if ignore_npoint_thresh > 0:
        # TODO(synk): ignore_npoint_thresh > 0 (small-object masking) branch not implemented.
        raise NotImplementedError("ignore_npoint_thresh > 0 not supported")

    B = mask.shape[0]
    K = mask.shape[-1]
    mask2 = jnp.asarray(mask).reshape(B, -1, K).astype(jnp.float32)
    segm2 = jnp.asarray(segm).reshape(B, -1).astype(jnp.int32)
    N = mask2.shape[1]
    assert segm2.shape[1] == N, "mask and segm disagree on the number of points"

    # Lane-dense layouts: points on the lane axis for both operands.  The mask
    # transpose is one extra HBM pass but makes the in-kernel argmax/one-hot
    # work far cheaper than a (TN, K) layout.
    mask_kn = jnp.swapaxes(mask2, 1, 2)          # (B, K, N)
    segm_p = segm2[:, None, :]                   # (B, 1, N)

    KP = max(128, ((K + 127) // 128) * 128)      # lane-dense cluster axis
    TN, vmem_limit = _pick_tiling(N, K, KP, _tile_cap)

    total_tiles = -(-N // TN)
    # Two-way tile split so both v7x TensorCores get parallel work when the
    # batch axis alone cannot be balanced (only when it costs no fully-OOB blocks).
    if B % 2 == 1 and total_tiles >= 2 and total_tiles % 2 == 0:
        n_split, tiles_per_split = 2, total_tiles // 2
    else:
        n_split, tiles_per_split = 1, total_tiles

    conf_dev, nmax_dev = _pallas_confusion(segm_p, mask_kn, N, KP, TN,
                                           n_split, tiles_per_split, vmem_limit)
    conf_np, nmax_np = jax.device_get((conf_dev, nmax_dev))   # blocks on the result
    conf = np.asarray(conf_np, dtype=np.float64).sum(axis=1)  # (B, KP, KP), exact ints
    n_gt_segms = np.asarray(nmax_np).reshape(B, -1).max(axis=1) + 1

    k_true = int(max(K, int(n_gt_segms.max())))
    if k_true > KP:
        # TODO(synk): GT label ids >= KP would need a rerun with a larger KP.
        raise NotImplementedError("more than %d clusters not supported" % KP)

    output_dict = {}
    if IOU in spec:
        all_mean_ious = []
        for b in range(B):
            c = conf[b, :k_true, :k_true]
            gt_sum = c.sum(axis=1, keepdims=True)
            pd_sum = c.sum(axis=0, keepdims=True)
            iou = c / (gt_sum + pd_sum - c + 1e-8)
            n_gt = int(n_gt_segms[b])
            rows, cols = _linear_sum_assignment_max(iou[:n_gt, :])
            all_mean_ious.append(float(np.mean(iou[:n_gt][rows, cols])))
        output_dict['iou'] = all_mean_ious
    if RI in spec:
        # agreements = N^2 - sum_g n_g^2 - sum_p m_p^2 + 2 * sum_{g,p} c_{gp}^2
        ris = []
        n2 = float(N) * float(N)
        for b in range(B):
            c = conf[b]
            same_gt = float((c.sum(axis=1) ** 2).sum())
            same_pd = float((c.sum(axis=0) ** 2).sum())
            both = float((c ** 2).sum())
            ris.append((n2 - same_gt - same_pd + 2.0 * both) / n2)
        output_dict['ri'] = ris
    return output_dict


def _reference(mask, segm):
    """Pure numpy reference of the torch forward (ignore_npoint_thresh=0)."""
    mask = np.asarray(mask)
    segm = np.asarray(segm)
    B, K = mask.shape[0], mask.shape[-1]
    m = mask.reshape(B, -1, K)
    g = segm.reshape(B, -1)
    N = m.shape[1]
    k_true = max(K, int(g.max()) + 1)
    pred = m.argmax(-1)
    ious, ris = [], []
    for b in range(B):
        n_gt = int(g[b].max()) + 1
        conf = np.zeros((k_true, k_true), np.float64)
        np.add.at(conf, (g[b], pred[b]), 1.0)
        gt_sum = conf.sum(1, keepdims=True)
        pd_sum = conf.sum(0, keepdims=True)
        iou = conf / (gt_sum + pd_sum - conf + 1e-8)
        rows, cols = _linear_sum_assignment_max(iou[:n_gt, :])
        ious.append(float(iou[:n_gt][rows, cols].mean()))
        same_gt = g[b][:, None] == g[b][None, :]
        same_pd = pred[b][:, None] == pred[b][None, :]
        ris.append(float((same_gt == same_pd).sum()) / (N * N))
    return ious, ris


if __name__ == "__main__":
    key = jax.random.PRNGKey(0)
    k1, k2, k3, k4 = jax.random.split(key, 4)

    # Small image-like case: B=2, 16x16 spatial, K=4 clusters.
    B, H, W, K = 2, 16, 16, 4
    segm = jax.random.randint(k1, (B, H, W), 0, 4)
    mask = jax.random.normal(k2, (B, H, W, K), dtype=jnp.float32)
    out = clustering_metrics(mask, segm)
    ref_iou, ref_ri = _reference(jax.device_get(mask), jax.device_get(segm))
    assert np.allclose(out['iou'], ref_iou, atol=1e-5), (out['iou'], ref_iou)
    assert np.allclose(out['ri'], ref_ri, atol=1e-5), (out['ri'], ref_ri)

    # Point-cloud-like case exercising multi-tile accumulation, the partial
    # (unpadded) last tile and the B==1 two-way tile split for dual-TC chips.
    B2, N2, K2 = 1, 1000, 4
    segm_pc = jax.random.randint(k3, (B2, N2), 0, 6)
    mask_pc = jax.random.normal(k4, (B2, N2, K2), dtype=jnp.float32)
    out2 = clustering_metrics(mask_pc, segm_pc, _tile_cap=256)
    ref_iou2, ref_ri2 = _reference(jax.device_get(mask_pc), jax.device_get(segm_pc))
    assert np.allclose(out2['iou'], ref_iou2, atol=1e-5), (out2['iou'], ref_iou2)
    assert np.allclose(out2['ri'], ref_ri2, atol=1e-5), (out2['ri'], ref_ri2)

    print("KERNEL_OK")
</pallas_src>

<mosaic_0001>
module attributes {stable_mosaic.version = 11 : i64} {
  func.func @_confusion_kernel(%arg0: i32, %arg1: i32, %arg2: i32, %arg3: memref<1xi32, #tpu.memory_space<smem>>, %arg4: memref<1x1x256xi32, #tpu.memory_space<vmem>>, %arg5: memref<1x4x256xf32, #tpu.memory_space<vmem>>, %arg6: memref<1x1x128x128xf32, #tpu.memory_space<vmem>>, %arg7: memref<1x1x1x1xi32, #tpu.memory_space<vmem>>) attributes {dimension_semantics = [#tpu.dimension_semantics<parallel>, #tpu.dimension_semantics<parallel>, #tpu.dimension_semantics<arbitrary>], iteration_bounds = array<i64: 2, 1, 1>, scalar_prefetch = 1 : i64, scratch_operands = 0 : i64, tpu.core_type = #tpu.core_type<tc>, window_params = [{transform_indices = @transform_0, window_bounds = array<i64: 1, 1, 256>}, {transform_indices = @transform_1, window_bounds = array<i64: 1, 4, 256>}, {transform_indices = @transform_2, window_bounds = array<i64: 1, 1, 128, 128>}, {transform_indices = @transform_3, window_bounds = array<i64: 1, 1, 1, 1>}]} {
    %c0_i32 = arith.constant 0 : i32
    %0 = arith.cmpi eq, %arg2, %c0_i32 : i32
    %1 = arith.extui %0 : i1 to i32
    %c0_i32_0 = arith.constant 0 : i32
    %2 = arith.cmpi ne, %1, %c0_i32_0 : i32
    scf.if %2 {
      %cst_32 = arith.constant 0.000000e+00 : f32
      %64 = vector.broadcast %cst_32 : f32 to vector<128x128xf32>
      %c0_33 = arith.constant 0 : index
      %c0_34 = arith.constant 0 : index
      %c0_35 = arith.constant 0 : index
      %c0_36 = arith.constant 0 : index
      %65 = vector.load %arg6[%c0_33, %c0_34, %c0_35, %c0_36] : memref<1x1x128x128xf32, #tpu.memory_space<vmem>>, vector<1x1x128x128xf32>
      %66 = vector.shape_cast %65 : vector<1x1x128x128xf32> to vector<128x128xf32>
      %67 = vector.shape_cast %64 : vector<128x128xf32> to vector<1x1x128x128xf32>
      tpu.vector_store %arg6[%c0_33, %c0_34, %c0_35, %c0_36], %67 {strides = array<i32>} : memref<1x1x128x128xf32, #tpu.memory_space<vmem>>, vector<1x1x128x128xf32>,
      %c-1_i32_37 = arith.constant -1 : i32
      %68 = vector.broadcast %c-1_i32_37 : i32 to vector<1x1xi32>
      %c0_38 = arith.constant 0 : index
      %c0_39 = arith.constant 0 : index
      %c0_40 = arith.constant 0 : index
      %c0_41 = arith.constant 0 : index
      %69 = vector.load %arg7[%c0_38, %c0_39, %c0_40, %c0_41] : memref<1x1x1x1xi32, #tpu.memory_space<vmem>>, vector<1x1x1x1xi32>
      %70 = vector.shape_cast %69 : vector<1x1x1x1xi32> to vector<1x1xi32>
      %71 = vector.shape_cast %68 : vector<1x1xi32> to vector<1x1x1x1xi32>
      tpu.vector_store %arg7[%c0_38, %c0_39, %c0_40, %c0_41], %71 {strides = array<i32>} : memref<1x1x1x1xi32, #tpu.memory_space<vmem>>, vector<1x1x1x1xi32>,
    } else {
    }
    %c1_i32 = arith.constant 1 : i32
    %3 = arith.muli %arg1, %c1_i32 : i32
    %4 = arith.addi %3, %arg2 : i32
    %c256_i32 = arith.constant 256 : i32
    %5 = arith.muli %4, %c256_i32 : i32
    %6 = tpu.iota {dimensions = array<i32: 1>} : vector<1x256xi32>
    %7 = vector.broadcast %5 : i32 to vector<1x256xi32>
    %8 = arith.addi %6, %7 : vector<1x256xi32>
    %c0 = arith.constant 0 : index
    %9 = memref.load %arg3[%c0] : memref<1xi32, #tpu.memory_space<smem>>
    %10 = vector.broadcast %9 : i32 to vector<1x256xi32>
    %11 = arith.cmpi slt, %8, %10 : vector<1x256xi32>
    %c0_1 = arith.constant 0 : index
    %c0_2 = arith.constant 0 : index
    %c0_3 = arith.constant 0 : index
    %12 = vector.load %arg4[%c0_1, %c0_2, %c0_3] : memref<1x1x256xi32, #tpu.memory_space<vmem>>, vector<1x1x256xi32>
    %13 = vector.shape_cast %12 : vector<1x1x256xi32> to vector<1x256xi32>
    %c-1_i32 = arith.constant -1 : i32
    %14 = vector.broadcast %c-1_i32 : i32 to vector<1x256xi32>
    %15 = arith.select %11, %13, %14 : vector<1x256xi1>, vector<1x256xi32>
    %c0_4 = arith.constant 0 : index
    %c0_5 = arith.constant 0 : index
    %c0_6 = arith.constant 0 : index
    %16 = vector.load %arg5[%c0_4, %c0_5, %c0_6] : memref<1x4x256xf32, #tpu.memory_space<vmem>>, vector<1x1x256xf32>
    %17 = vector.shape_cast %16 : vector<1x1x256xf32> to vector<1x256xf32>
    %c0_i32_7 = arith.constant 0 : i32
    %18 = vector.broadcast %c0_i32_7 : i32 to vector<1x256xi32>
    %c0_8 = arith.constant 0 : index
    %c1 = arith.constant 1 : index
    %c0_9 = arith.constant 0 : index
    %19 = vector.load %arg5[%c0_8, %c1, %c0_9] : memref<1x4x256xf32, #tpu.memory_space<vmem>>, vector<1x1x256xf32>
    %20 = vector.shape_cast %19 : vector<1x1x256xf32> to vector<1x256xf32>
    %21 = arith.cmpf ogt, %20, %17 : vector<1x256xf32>
    %22 = arith.select %21, %20, %17 : vector<1x256xi1>, vector<1x256xf32>
    %c1_i32_10 = arith.constant 1 : i32
    %23 = vector.broadcast %c1_i32_10 : i32 to vector<1x256xi32>
    %24 = arith.select %21, %23, %18 : vector<1x256xi1>, vector<1x256xi32>
    %c0_11 = arith.constant 0 : index
    %c2 = arith.constant 2 : index
    %c0_12 = arith.constant 0 : index
    %25 = vector.load %arg5[%c0_11, %c2, %c0_12] : memref<1x4x256xf32, #tpu.memory_space<vmem>>, vector<1x1x256xf32>
    %26 = vector.shape_cast %25 : vector<1x1x256xf32> to vector<1x256xf32>
    %27 = arith.cmpf ogt, %26, %22 : vector<1x256xf32>
    %28 = arith.select %27, %26, %22 : vector<1x256xi1>, vector<1x256xf32>
    %c2_i32 = arith.constant 2 : i32
    %29 = vector.broadcast %c2_i32 : i32 to vector<1x256xi32>
    %30 = arith.select %27, %29, %24 : vector<1x256xi1>, vector<1x256xi32>
    %c0_13 = arith.constant 0 : index
    %c3 = arith.constant 3 : index
    %c0_14 = arith.constant 0 : index
    %31 = vector.load %arg5[%c0_13, %c3, %c0_14] : memref<1x4x256xf32, #tpu.memory_space<vmem>>, vector<1x1x256xf32>
    %32 = vector.shape_cast %31 : vector<1x1x256xf32> to vector<1x256xf32>
    %33 = arith.cmpf ogt, %32, %28 : vector<1x256xf32>
    %c3_i32 = arith.constant 3 : i32
    %34 = vector.broadcast %c3_i32 : i32 to vector<1x256xi32>
    %35 = arith.select %33, %34, %30 : vector<1x256xi1>, vector<1x256xi32>
    %36 = tpu.iota {dimensions = array<i32: 0>} : vector<128x1xi32>
    %37 = vector.broadcast %36 : vector<128x1xi32> to vector<128x256xi32>
    %38 = vector.broadcast %15 : vector<1x256xi32> to vector<128x256xi32>
    %39 = arith.cmpi eq, %37, %38 : vector<128x256xi32>
    %40 = arith.extui %39 : vector<128x256xi1> to vector<128x256xi32>
    %41 = arith.sitofp %40 : vector<128x256xi32> to vector<128x256xf32>
    %42 = arith.truncf %41 : vector<128x256xf32> to vector<128x256xbf16>
    %43 = vector.broadcast %36 : vector<128x1xi32> to vector<128x256xi32>
    %44 = vector.broadcast %35 : vector<1x256xi32> to vector<128x256xi32>
    %45 = arith.cmpi eq, %43, %44 : vector<128x256xi32>
    %46 = arith.extui %45 : vector<128x256xi1> to vector<128x256xi32>
    %47 = arith.sitofp %46 : vector<128x256xi32> to vector<128x256xf32>
    %48 = arith.truncf %47 : vector<128x256xf32> to vector<128x256xbf16>
    %cst = arith.constant dense<0.000000e+00> : vector<128x128xf32>
    %49 = tpu.matmul %42, %48, %cst {dimension_numbers = #tpu.dot_dimension_numbers<[1], [1], [0], [0], [0, 0, 1, 0], [], []>} : vector<128x256xbf16>, vector<128x256xbf16>, vector<128x128xf32> -> vector<128x128xf32>
    %c0_15 = arith.constant 0 : index
    %c0_16 = arith.constant 0 : index
    %c0_17 = arith.constant 0 : index
    %c0_18 = arith.constant 0 : index
    %50 = vector.load %arg6[%c0_15, %c0_16, %c0_17, %c0_18] : memref<1x1x128x128xf32, #tpu.memory_space<vmem>>, vector<1x1x128x128xf32>
    %51 = vector.shape_cast %50 : vector<1x1x128x128xf32> to vector<128x128xf32>
    %52 = arith.addf %51, %49 : vector<128x128xf32>
    %c0_19 = arith.constant 0 : index
    %c0_20 = arith.constant 0 : index
    %c0_21 = arith.constant 0 : index
    %c0_22 = arith.constant 0 : index
    %53 = vector.load %arg6[%c0_19, %c0_20, %c0_21, %c0_22] : memref<1x1x128x128xf32, #tpu.memory_space<vmem>>, vector<1x1x128x128xf32>
    %54 = vector.shape_cast %53 : vector<1x1x128x128xf32> to vector<128x128xf32>
    %55 = vector.shape_cast %52 : vector<128x128xf32> to vector<1x1x128x128xf32>
    tpu.vector_store %arg6[%c0_19, %c0_20, %c0_21, %c0_22], %55 {strides = array<i32>} : memref<1x1x128x128xf32, #tpu.memory_space<vmem>>, vector<1x1x128x128xf32>,
    %c0_23 = arith.constant 0 : index
    %c0_24 = arith.constant 0 : index
    %c0_25 = arith.constant 0 : index
    %c0_26 = arith.constant 0 : index
    %56 = vector.load %arg7[%c0_23, %c0_24, %c0_25, %c0_26] : memref<1x1x1x1xi32, #tpu.memory_space<vmem>>, vector<1x1x1x1xi32>
    %57 = vector.shape_cast %56 : vector<1x1x1x1xi32> to vector<1x1xi32>
    %cst_27 = arith.constant dense<-2147483648> : vector<1xi32>
    %58 = vector.multi_reduction <maxsi>, %15, %cst_27 [1] : vector<1x256xi32> to vector<1xi32>
    %59 = vector.shape_cast %58 : vector<1xi32> to vector<1x1xi32>
    %60 = arith.maxsi %57, %59 : vector<1x1xi32>
    %c0_28 = arith.constant 0 : index
    %c0_29 = arith.constant 0 : index
    %c0_30 = arith.constant 0 : index
    %c0_31 = arith.constant 0 : index
    %61 = vector.load %arg7[%c0_28, %c0_29, %c0_30, %c0_31] : memref<1x1x1x1xi32, #tpu.memory_space<vmem>>, vector<1x1x1x1xi32>
    %62 = vector.shape_cast %61 : vector<1x1x1x1xi32> to vector<1x1xi32>
    %63 = vector.shape_cast %60 : vector<1x1xi32> to vector<1x1x1x1xi32>
    tpu.vector_store %arg7[%c0_28, %c0_29, %c0_30, %c0_31], %63 {strides = array<i32>} : memref<1x1x1x1xi32, #tpu.memory_space<vmem>>, vector<1x1x1x1xi32>,
    return
  }
  func.func @transform_0(%arg0: i32, %arg1: i32, %arg2: i32, %arg3: memref<1xi32, #tpu.memory_space<smem>>) -> (i32, i32, i32) {
    %c1_i32 = arith.constant 1 : i32
    %0 = arith.muli %arg1, %c1_i32 : i32
    %1 = arith.addi %0, %arg2 : i32
    %c0_i32 = arith.constant 0 : i32
    %c0_i32_0 = arith.constant 0 : i32
    return %arg0, %c0_i32, %1 : i32, i32, i32
  }
  func.func @transform_1(%arg0: i32, %arg1: i32, %arg2: i32, %arg3: memref<1xi32, #tpu.memory_space<smem>>) -> (i32, i32, i32) {
    %c1_i32 = arith.constant 1 : i32
    %0 = arith.muli %arg1, %c1_i32 : i32
    %1 = arith.addi %0, %arg2 : i32
    %c0_i32 = arith.constant 0 : i32
    %c0_i32_0 = arith.constant 0 : i32
    return %arg0, %c0_i32, %1 : i32, i32, i32
  }
  func.func @transform_2(%arg0: i32, %arg1: i32, %arg2: i32, %arg3: memref<1xi32, #tpu.memory_space<smem>>) -> (i32, i32, i32, i32) {
    %c0_i32 = arith.constant 0 : i32
    %c0_i32_0 = arith.constant 0 : i32
    %c0_i32_1 = arith.constant 0 : i32
    return %arg0, %arg1, %c0_i32, %c0_i32_0 : i32, i32, i32, i32
  }
  func.func @transform_3(%arg0: i32, %arg1: i32, %arg2: i32, %arg3: memref<1xi32, #tpu.memory_space<smem>>) -> (i32, i32, i32, i32) {
    %c0_i32 = arith.constant 0 : i32
    %c0_i32_0 = arith.constant 0 : i32
    %c0_i32_1 = arith.constant 0 : i32
    return %arg0, %arg1, %c0_i32, %c0_i32_0 : i32, i32, i32, i32
  }
}

</mosaic_0001>

<llo_original>
// kernel: tpu_custom_call.1
$region0: #{tpu_custom_call.1}
  #allocation0 [shape = 'u32[]', space=smem, size = 0x4, offset = 0x4, fixed_abs, tag = 'smem constant byte address 0x4 - core index']
  #allocation1 [shape = 'u32[144,128]{1,0:T(1,128)}', space=vmem, size = 0x12000, scoped, tag = 'internal scratch']
  #allocation2 [shape = 's32[1]{0}', space=sflag, size = 0x4, scoped, tag = 'scoped memory for tpu_custom_call.1']
  #allocation3 [shape = 's32[1]{0:T(128)S(6)}', space=smem, size = 0x200, scoped, tag = 'prefetched SMEM operand 0']
  %s0 = inlined_call_operand.<no memory space> [shape: s32[1], index: 0, kind: input, shape index: {}]
  %s1 = inlined_call_operand.hbm [shape: s32[2,1,256], index: 1, kind: input, shape index: {}]
  %s2 = inlined_call_operand.hbm [shape: f32[2,4,256], index: 2, kind: input, shape index: {}]
  %s3 = inlined_call_operand.hbm [shape: f32[2,1,128,128], index: 3, kind: output, shape index: {0}]
  %s4 = inlined_call_operand.vmem [shape: s32[2,1,1,1], index: 4, kind: output, shape index: {1}]
  %5 = xla_tuple %s3, %s4
  %s6 = sld [smem:[#allocation0]]
  $region61: #{tpu_custom_call.1} parent=0
    _
  %s8 = ssub.s32 1, %s6
  %s9 = scalar_select 0, %s8, %s6
  %10 = sst [smem:[#allocation3]] %s0
  $region1: #{tpu_custom_call.1} parent=0
    #allocation4 [shape = 'u8[2048]{0}', space=vmem, size = 0x800, scoped, tag = 'input window, operand 1']
    #allocation5 [shape = 's32[2]{0}', space=sflag, size = 0x8, scoped, tag = 'scoped memory for tpu_custom_call.1']
    #allocation6 [shape = 's32[2]{0}', space=sflag, size = 0x8, scoped, tag = 'scoped memory for tpu_custom_call.1']
    #allocation7 [shape = 'u8[8192]{0}', space=vmem, size = 0x2000, scoped, tag = 'input window, operand 2']
    #allocation8 [shape = 's32[2]{0}', space=sflag, size = 0x8, scoped, tag = 'scoped memory for tpu_custom_call.1']
    #allocation9 [shape = 'u8[131072]{0}', space=vmem, size = 0x20000, scoped, tag = 'output window, operand 0']
    %11 = vsyncpa [#allocation5], 0
    %s12 = scalar_lea.sflag [#allocation5], 1
    %13 = vsyncpa %s12, 0
    %14 = vsyncpa [#allocation8], 0
    %s15 = scalar_lea.sflag [#allocation8], 1
    %16 = vsyncpa %s15, 0
    %17 = vsyncpa [#allocation6], 0
    %s18 = scalar_lea.sflag [#allocation6], 1
    %19 = vsyncpa %s18, 0
    loop: start=0, step=1, limit=4
    $region2: #{tpu_custom_call.1} parent=1 // loop_pre_header
      _
    $region3: #{tpu_custom_call.1} parent=1 // loop_header
      %s21 = sphi 0, %s25
      %p22 = scmp.ge.s32.totalorder %s21, 4
      %s28 = sphi 0, %s47
      %s29 = sphi 0, %s43
      %s30 = sphi 0, %s39
      %s31 = sphi 0, %s28
      %s32 = sphi 0, %s29
      %s33 = sphi 0, %s30
      %s34 = sphi 0, %s31
      %s35 = sphi 0, %s32
      %s36 = sphi 0, %s33
      %s54 = sphi 0, %s56
      %s57 = sphi 0, %s54
      %s58 = sphi 0, %s57
      %s74 = sphi 0, %s58
      %s84 = sphi 0, %s86
      %s87 = sphi 0, %s84
      %s88 = sphi 0, %s87
      %s104 = sphi 0, %s88
      %s112 = sphi 0, %s114
      %s115 = sphi 0, %s112
      %s116 = sphi 0, %s115
      %s132 = sphi 0, %s116
      %s140 = sphi 0, %s142
      %s143 = sphi 0, %s140
      %s144 = sphi 0, %s143
      %s160 = sphi 0, %s144
    $region4: #{tpu_custom_call.1} parent=1 // loop_header_branch
      %24 = sbr.rel (%p22) target = $region8
    $region5: #{tpu_custom_call.1} parent=1 // loop_body
      %s26 = ssub.s32 %s21, 1
      %s27 = ssub.s32 %s21, 2
      %s37 = sadd.s32 1, %s30
      %p38 = scmp.ge.s32.totalorder %s37, 1
      %s39 = scalar_select %p38, 0, %s37
      %s40 = sadd.s32 1, %s29
      %s41 = scalar_select %p38, %s40, %s29
      %p42 = scmp.ge.s32.totalorder %s41, 1
      %s43 = scalar_select %p42, 0, %s41
      %s44 = sadd.s32 1, %s28
      %s45 = scalar_select %p42, %s44, %s28
      %p46 = scmp.ge.s32.totalorder %s45, 2
      %s47 = scalar_select %p46, 0, %s45
      %s48 = sadd.s32 %s29, %s30
      %s49 = sadd.s32 %s43, %s39
      %s50 = ssub.s32 %s28, %s47
      %s51 = ssub.s32 %s48, %s49
      %s52 = sor.u32 %s50, %s51
      %p53 = scmp.eq.s32.totalorder %s52, 0
      %s55 = sadd.s32 %s54, 1
      %s56 = scalar_select %p53, %s54, %s55
      %p59 = pneg %p53
      %p60 = scmp.eq.s32.totalorder %s21, 1
      %p61 = por %p59, %p60
      %p62 = scmp.ne.s32.totalorder %s54, %s57
      %p63 = scmp.eq.s32.totalorder %s21, 0
      %p64 = por %p62, %p63
      %p65 = scmp.ne.s32.totalorder %s54, %s57
      %p66 = scmp.eq.s32.totalorder %s26, 1
      %p67 = por %p65, %p66
      %p68 = scmp.ne.s32.totalorder %s57, %s58
      %p69 = scmp.eq.s32.totalorder %s26, 0
      %p70 = por %p68, %p69
      %p71 = scmp.ne.s32.totalorder %s57, %s58
      %p72 = scmp.eq.s32.totalorder %s27, 1
      %p73 = por %p71, %p72
      %p75 = scmp.ne.s32.totalorder %s58, %s74
      %p76 = scmp.eq.s32.totalorder %s27, 0
      %p77 = por %p75, %p76
      %s78 = sadd.s32 %s29, %s30
      %s79 = sadd.s32 %s43, %s39
      %s80 = ssub.s32 %s28, %s47
      %s81 = ssub.s32 %s78, %s79
      %s82 = sor.u32 %s80, %s81
      %p83 = scmp.eq.s32.totalorder %s82, 0
      %s85 = sadd.s32 %s84, 1
      %s86 = scalar_select %p83, %s84, %s85
      %p89 = pneg %p83
      %p90 = scmp.eq.s32.totalorder %s21, 1
      %p91 = por %p89, %p90
      %p92 = scmp.ne.s32.totalorder %s84, %s87
      %p93 = scmp.eq.s32.totalorder %s21, 0
      %p94 = por %p92, %p93
      %p95 = scmp.ne.s32.totalorder %s84, %s87
      %p96 = scmp.eq.s32.totalorder %s26, 1
      %p97 = por %p95, %p96
      %p98 = scmp.ne.s32.totalorder %s87, %s88
      %p99 = scmp.eq.s32.totalorder %s26, 0
      %p100 = por %p98, %p99
      %p101 = scmp.ne.s32.totalorder %s87, %s88
      %p102 = scmp.eq.s32.totalorder %s27, 1
      %p103 = por %p101, %p102
      %p105 = scmp.ne.s32.totalorder %s88, %s104
      %p106 = scmp.eq.s32.totalorder %s27, 0
      %p107 = por %p105, %p106
      %s108 = ssub.s32 %s28, %s47
      %s109 = ssub.s32 %s29, %s43
      %s110 = sor.u32 %s108, %s109
      %p111 = scmp.eq.s32.totalorder %s110, 0
      %s113 = sadd.s32 %s112, 1
      %s114 = scalar_select %p111, %s112, %s113
      %p117 = pneg %p111
      %p118 = scmp.eq.s32.totalorder %s21, 1
      %p119 = por %p117, %p118
      %p120 = scmp.ne.s32.totalorder %s112, %s115
      %p121 = scmp.eq.s32.totalorder %s21, 0
      %p122 = por %p120, %p121
      %p123 = scmp.ne.s32.totalorder %s112, %s115
      %p124 = scmp.eq.s32.totalorder %s26, 1
      %p125 = por %p123, %p124
      %p126 = scmp.ne.s32.totalorder %s115, %s116
      %p127 = scmp.eq.s32.totalorder %s26, 0
      %p128 = por %p126, %p127
      %p129 = scmp.ne.s32.totalorder %s115, %s116
      %p130 = scmp.eq.s32.totalorder %s27, 1
      %p131 = por %p129, %p130
      %p133 = scmp.ne.s32.totalorder %s116, %s132
      %p134 = scmp.eq.s32.totalorder %s27, 0
      %p135 = por %p133, %p134
      %s136 = ssub.s32 %s28, %s47
      %s137 = ssub.s32 %s29, %s43
      %s138 = sor.u32 %s136, %s137
      %p139 = scmp.eq.s32.totalorder %s138, 0
      %s141 = sadd.s32 %s140, 1
      %s142 = scalar_select %p139, %s140, %s141
      %p145 = pneg %p139
      %p146 = scmp.eq.s32.totalorder %s21, 1
      %p147 = por %p145, %p146
      %p148 = scmp.ne.s32.totalorder %s140, %s143
      %p149 = scmp.eq.s32.totalorder %s21, 0
      %p150 = por %p148, %p149
      %p151 = scmp.ne.s32.totalorder %s140, %s143
      %p152 = scmp.eq.s32.totalorder %s26, 1
      %p153 = por %p151, %p152
      %p154 = scmp.ne.s32.totalorder %s143, %s144
      %p155 = scmp.eq.s32.totalorder %s26, 0
      %p156 = por %p154, %p155
      %p157 = scmp.ne.s32.totalorder %s143, %s144
      %p158 = scmp.eq.s32.totalorder %s27, 1
      %p159 = por %p157, %p158
      %p161 = scmp.ne.s32.totalorder %s144, %s160
      %p162 = scmp.eq.s32.totalorder %s27, 0
      %p163 = por %p161, %p162
      %p164 = scmp.le.s32.totalorder 1, %s21
      %p165 = scmp.lt.s32.totalorder %s21, 3
      %p166 = pnand %p164, %p165
      %p167 = pneg %p166
      // Predicated region
      $region9: #{tpu_custom_call.1} parent=5 // pred_check
        _
      $region10: #{tpu_custom_call.1} parent=5 // pred_check_branch
        %169 = sbr.rel (%p166) target = $region12
      $region11: #{tpu_custom_call.1} parent=5 // pred_region
        %s170 = ssub.s32 %s21, 1
      $region12: #{tpu_custom_call.1} parent=5 // pred_fallthru
        _
      %p171 = scmp.lt.s32.totalorder %s21, 2
      // Predicated region
      $region13: #{tpu_custom_call.1} parent=5 // pred_check
        %p172 = pneg %p171
      $region14: #{tpu_custom_call.1} parent=5 // pred_check_branch
        %174 = sbr.rel (%p172) target = $region16
      $region15: #{tpu_custom_call.1} parent=5 // pred_region
        // Predicated region
        $region17: #{tpu_custom_call.1} parent=15 // pred_check
          %p175 = pneg %p64
        $region18: #{tpu_custom_call.1} parent=15 // pred_check_branch
          %177 = sbr.rel (%p175) target = $region20
        $region19: #{tpu_custom_call.1} parent=15 // pred_region
          %s178 = sand.u32 %s54, 1
          %s179 = scalar_lea.sflag [#allocation5], %s178
          %s180 = sand.u32 %s54, 1
          %s181 = smul.addr %s180, 2
          %s182 = scalar_lea.vmem [#allocation4], %s181
          %s183 = sadd.s32 %s29, %s30
          %s184 = smul.u32 2, %s183
          %s186 = ssub.s32 32, 32
          %187 = vsyncadd %s179, %s186
          %s188 = smul.addr %s28, 2
          %s189 = sadd.s32 %s184, %s188
          %s190 = smul.addr %s189, 16
          %s191 = scalar_lea.hbm %s1, %s190
          %s193 = sshll.u32 %s182, 4
          %s194 = int_to_ptr.vmem [resolvable:$true] %s193
          %196 = dma.hbm_to_vmem [thread:$0]  %s191, 32, %s194, %s179
        $region20: #{tpu_custom_call.1} parent=15 // pred_fallthru
          _
        // Predicated region
        $region21: #{tpu_custom_call.1} parent=15 // pred_check
          %p197 = pneg %p94
        $region22: #{tpu_custom_call.1} parent=15 // pred_check_branch
          %199 = sbr.rel (%p197) target = $region24
        $region23: #{tpu_custom_call.1} parent=15 // pred_region
          %s200 = sand.u32 %s84, 1
          %s201 = scalar_lea.sflag [#allocation8], %s200
          %s202 = sand.u32 %s84, 1
          %s203 = smul.addr %s202, 8
          %s204 = scalar_lea.vmem [#allocation7], %s203
          %s205 = sadd.s32 %s29, %s30
          %s206 = smul.u32 2, %s205
          %s208 = ssub.s32 128, 128
          %209 = vsyncadd %s201, %s208
          %s210 = smul.addr %s28, 2
          %s211 = sadd.s32 %s206, %s210
          %s212 = smul.addr %s211, 64
          %s213 = scalar_lea.hbm %s2, %s212
          %s215 = sshll.u32 %s204, 4
          %s216 = int_to_ptr.vmem [resolvable:$true] %s215
          %218 = dma.hbm_to_vmem [thread:$0]  %s213, 128, %s216, %s201
        $region24: #{tpu_custom_call.1} parent=15 // pred_fallthru
          _
      $region16: #{tpu_custom_call.1} parent=5 // pred_fallthru
        _
      %p219 = scmp.le.s32.totalorder 1, %s21
      %p220 = scmp.lt.s32.totalorder %s21, 3
      %p221 = pnand %p219, %p220
      %p222 = pneg %p221
      // Predicated region
      $region25: #{tpu_custom_call.1} parent=5 // pred_check
        _
      $region26: #{tpu_custom_call.1} parent=5 // pred_check_branch
        %224 = sbr.rel (%p221) target = $region28
      $region27: #{tpu_custom_call.1} parent=5 // pred_region
        %s225 = ssub.s32 %s21, 1
        %s226 = sand.u32 %s57, 1
        %s227 = scalar_lea.sflag [#allocation5], %s226
        %s228 = sand.u32 %s57, 1
        %s229 = smul.addr %s228, 2
        %s230 = scalar_lea.vmem [#allocation4], %s229
        // Predicated region
        $region29: #{tpu_custom_call.1} parent=27 // pred_check
          %p231 = pneg %p70
        $region30: #{tpu_custom_call.1} parent=27 // pred_check_branch
          %233 = sbr.rel (%p231) target = $region32
        $region31: #{tpu_custom_call.1} parent=27 // pred_region
          %234 = dma.done %s227, 32
        $region32: #{tpu_custom_call.1} parent=27 // pred_fallthru
          _
        %s235 = sand.u32 %s87, 1
        %s236 = scalar_lea.sflag [#allocation8], %s235
        %s237 = sand.u32 %s87, 1
        %s238 = smul.addr %s237, 8
        %s239 = scalar_lea.vmem [#allocation7], %s238
        // Predicated region
        $region33: #{tpu_custom_call.1} parent=27 // pred_check
          %p240 = pneg %p100
        $region34: #{tpu_custom_call.1} parent=27 // pred_check_branch
          %242 = sbr.rel (%p240) target = $region36
        $region35: #{tpu_custom_call.1} parent=27 // pred_region
          %243 = dma.done %s236, 128
        $region36: #{tpu_custom_call.1} parent=27 // pred_fallthru
          _
        %s244 = sand.u32 %s57, 1
        %s245 = scalar_lea.sflag [#allocation5], %s244
        %s246 = sand.u32 %s57, 1
        %s247 = smul.addr %s246, 2
        %s248 = scalar_lea.vmem [#allocation4], %s247
        %p249 = pneg %p70
        %p250 = pneg %p67
        %s251 = sand.u32 %s87, 1
        %s252 = scalar_lea.sflag [#allocation8], %s251
        %s253 = sand.u32 %s87, 1
        %s254 = smul.addr %s253, 8
        %s255 = scalar_lea.vmem [#allocation7], %s254
        %p256 = pneg %p100
        %p257 = pneg %p97
        %p258 = pneg %p128
        %p259 = pneg %p125
        %s260 = sand.u32 %s115, 1
        %s261 = scalar_lea.sflag [#allocation6], %s260
        %s262 = sand.u32 %s115, 1
        %s263 = smul.addr %s262, 128
        %s264 = scalar_lea.vmem [#allocation9], %s263
        %p265 = pneg %p156
        %p266 = pneg %p153
        %p267 = scmp.lt.s32.totalorder %s31, 1
        %s268 = scalar_select %p267, %s31, 1
        %p269 = scmp.lt.s32.totalorder %s32, 0
        %s270 = scalar_select %p269, %s32, 0
        %s271 = sadd.s32 %s270, %s268
        %s272 = scalar_lea.vmem %s4, %s271
        %s273 = sadd.s32 %s32, %s33
        %s274 = smul.u32 2, %s273
        %s275 = sadd.s32 %s32, %s33
        %s276 = smul.u32 2, %s275
        %p277 = scmp.lt.s32.totalorder %s31, 1
        %s278 = scalar_select %p277, %s31, 1
        %p279 = scmp.lt.s32.totalorder %s32, 0
        %s280 = scalar_select %p279, %s32, 0
        %s281 = sadd.s32 %s280, %s278
        %s282 = scalar_lea.vmem %s4, %s281
        %p284 = scmp.eq.s32.totalorder %s33, 0
        // Predicated region
        $region37: #{tpu_custom_call.1} parent=27 // pred_check
          %p285 = pneg %p284
        $region38: #{tpu_custom_call.1} parent=27 // pred_check_branch
          %287 = sbr.rel (%p285) target = $region40
        $region39: #{tpu_custom_call.1} parent=27 // pred_region
          %288 = vst [vmem:[%s264] sm:$0xff] 0.0
          %289 = vst [vmem:[%s264 + $0x8] sm:$0xff] 0.0
          %290 = vst [vmem:[%s264 + $0x10] sm:$0xff] 0.0
          %291 = vst [vmem:[%s264 + $0x18] sm:$0xff] 0.0
          %292 = vst [vmem:[%s264 + $0x20] sm:$0xff] 0.0
          %293 = vst [vmem:[%s264 + $0x28] sm:$0xff] 0.0
          %294 = vst [vmem:[%s264 + $0x30] sm:$0xff] 0.0
          %295 = vst [vmem:[%s264 + $0x38] sm:$0xff] 0.0
          %296 = vst [vmem:[%s264 + $0x40] sm:$0xff] 0.0
          %297 = vst [vmem:[%s264 + $0x48] sm:$0xff] 0.0
          %298 = vst [vmem:[%s264 + $0x50] sm:$0xff] 0.0
          %299 = vst [vmem:[%s264 + $0x58] sm:$0xff] 0.0
          %300 = vst [vmem:[%s264 + $0x60] sm:$0xff] 0.0
          %301 = vst [vmem:[%s264 + $0x68] sm:$0xff] 0.0
          %302 = vst [vmem:[%s264 + $0x70] sm:$0xff] 0.0
          %303 = vst [vmem:[%s264 + $0x78] sm:$0xff] 0.0
          %vm304 = vcmask 0
          %305 = vst.msk [vmem:[%s282] sm:$0x1] %vm304, 4294967295
        $region40: #{tpu_custom_call.1} parent=27 // pred_fallthru
          _
        %s306 = sadd.s32 %s32, %s33
        %s307 = smul.u32 %s306, 256
        %v308 = vlaneseq
        %v309 = vand.u32 %v308, 127
        %v310 = vadd.s32 %v309, 128
        %v311 = vstv %s307
        %v312 = vadd.s32 %v309, %v311
        %v313 = vadd.s32 %v310, %v311
        %s314 = sld [smem:[#allocation3]]
        %v315 = vstv %s314
        %vm316 = vcmp.lt.s32.totalorder %v312, %v315
        %vm317 = vcmp.lt.s32.totalorder %v313, %v315
        %v318 = vld [vmem:[%s230] sm:$0x3]
        %v319 = vlaneseq
        %v320 = vshrl.u32 %v319, 7
        %v321 = vsub.s32 0, %v320
        %v322 = vrot.slane %v318, %v321
        %v323 = vlaneseq
        %v324 = vshrl.u32 %v323, 7
        %v325 = vsub.s32 1, %v324
        %v326 = vrot.slane %v318, %v325
        %v327 = vsel %vm316, %v322, 4294967295
        %v328 = vsel %vm317, %v326, 4294967295
        %v329 = vld [vmem:[%s239] ss:$4 sm:$0x3]
        %s330 = scalar_lea.vmem %s239, 1 [#allocation7]
        %v331 = vld [vmem:[%s330] ss:$4 sm:$0x3]
        %vm332 = vcmp.gt.f32.partialorder %v331, %v329
        %v333 = vsel %vm332, %v331, %v329
        %v334 = vsel %vm332, 1, 0
        %s335 = scalar_lea.vmem %s239, 2 [#allocation7]
        %v336 = vld [vmem:[%s335] ss:$4 sm:$0x3]
        %vm337 = vcmp.gt.f32.partialorder %v336, %v333
        %v338 = vsel %vm337, %v336, %v333
        %v339 = vsel %vm337, 2, %v334
        %s340 = scalar_lea.vmem %s239, 3 [#allocation7]
        %v341 = vld [vmem:[%s340] ss:$4 sm:$0x3]
        %vm342 = vcmp.gt.f32.partialorder %v341, %v338
        %v343 = vsel %vm342, 3, %v339
        %v344 = vlaneseq
        %v345 = vshrl.u32 %v344, 7
        %v346 = vadd.s32 %v345, 8
        %v347 = vadd.s32 %v345, 16
        %v348 = vadd.s32 %v345, 24
        %v349 = vadd.s32 %v345, 32
        %v350 = vadd.s32 %v345, 40
        %v351 = vadd.s32 %v345, 48
        %v352 = vadd.s32 %v345, 56
        %v353 = vadd.s32 %v345, 64
        %v354 = vadd.s32 %v345, 72
        %v355 = vadd.s32 %v345, 80
        %v356 = vadd.s32 %v345, 88
        %v357 = vadd.s32 %v345, 96
        %v358 = vadd.s32 %v345, 104
        %v359 = vadd.s32 %v345, 112
        %v360 = vadd.s32 %v345, 120
        %v361 = vlaneseq
        %v362 = vshrl.u32 %v361, 7
        %v363 = vsub.s32 0, %v362
        %v364 = vrot.slane %v327, %v363
        %v365 = vlaneseq
        %v366 = vshrl.u32 %v365, 7
        %v367 = vsub.s32 0, %v366
        %v368 = vrot.slane %v328, %v367
        %vm369 = vcmp.eq.s32.totalorder %v345, %v364
        %vm370 = vcmp.eq.s32.totalorder %v345, %v368
        %vm371 = vcmp.eq.s32.totalorder %v346, %v364
        %vm372 = vcmp.eq.s32.totalorder %v346, %v368
        %vm373 = vcmp.eq.s32.totalorder %v347, %v364
        %vm374 = vcmp.eq.s32.totalorder %v347, %v368
        %vm375 = vcmp.eq.s32.totalorder %v348, %v364
        %vm376 = vcmp.eq.s32.totalorder %v348, %v368
        %vm377 = vcmp.eq.s32.totalorder %v349, %v364
        %vm378 = vcmp.eq.s32.totalorder %v349, %v368
        %vm379 = vcmp.eq.s32.totalorder %v350, %v364
        %vm380 = vcmp.eq.s32.totalorder %v350, %v368
        %vm381 = vcmp.eq.s32.totalorder %v351, %v364
        %vm382 = vcmp.eq.s32.totalorder %v351, %v368
        %vm383 = vcmp.eq.s32.totalorder %v352, %v364
        %vm384 = vcmp.eq.s32.totalorder %v352, %v368
        %vm385 = vcmp.eq.s32.totalorder %v353, %v364
        %vm386 = vcmp.eq.s32.totalorder %v353, %v368
        %vm387 = vcmp.eq.s32.totalorder %v354, %v364
        %vm388 = vcmp.eq.s32.totalorder %v354, %v368
        %vm389 = vcmp.eq.s32.totalorder %v355, %v364
        %vm390 = vcmp.eq.s32.totalorder %v355, %v368
        %vm391 = vcmp.eq.s32.totalorder %v356, %v364
        %vm392 = vcmp.eq.s32.totalorder %v356, %v368
        %vm393 = vcmp.eq.s32.totalorder %v357, %v364
        %vm394 = vcmp.eq.s32.totalorder %v357, %v368
        %vm395 = vcmp.eq.s32.totalorder %v358, %v364
        %vm396 = vcmp.eq.s32.totalorder %v358, %v368
        %vm397 = vcmp.eq.s32.totalorder %v359, %v364
        %vm398 = vcmp.eq.s32.totalorder %v359, %v368
        %vm399 = vcmp.eq.s32.totalorder %v360, %v364
        %vm400 = vcmp.eq.s32.totalorder %v360, %v368
        %v401 = vsel %vm369, 1, 0
        %v402 = vsel %vm370, 1, 0
        %v403 = vsel %vm371, 1, 0
        %v404 = vsel %vm372, 1, 0
        %v405 = vsel %vm373, 1, 0
        %v406 = vsel %vm374, 1, 0
        %v407 = vsel %vm375, 1, 0
        %v408 = vsel %vm376, 1, 0
        %v409 = vsel %vm377, 1, 0
        %v410 = vsel %vm378, 1, 0
        %v411 = vsel %vm379, 1, 0
        %v412 = vsel %vm380, 1, 0
        %v413 = vsel %vm381, 1, 0
        %v414 = vsel %vm382, 1, 0
        %v415 = vsel %vm383, 1, 0
        %v416 = vsel %vm384, 1, 0
        %v417 = vsel %vm385, 1, 0
        %v418 = vsel %vm386, 1, 0
        %v419 = vsel %vm387, 1, 0
        %v420 = vsel %vm388, 1, 0
        %v421 = vsel %vm389, 1, 0
        %v422 = vsel %vm390, 1, 0
        %v423 = vsel %vm391, 1, 0
        %v424 = vsel %vm392, 1, 0
        %v425 = vsel %vm393, 1, 0
        %v426 = vsel %vm394, 1, 0
        %v427 = vsel %vm395, 1, 0
        %v428 = vsel %vm396, 1, 0
        %v429 = vsel %vm397, 1, 0
        %v430 = vsel %vm398, 1, 0
        %v431 = vsel %vm399, 1, 0
        %v432 = vsel %vm400, 1, 0
        %v433 = vcvt.s32.f32 %v401
        %v434 = vcvt.s32.f32 %v402
        %v435 = vcvt.s32.f32 %v403
        %v436 = vcvt.s32.f32 %v404
        %v437 = vcvt.s32.f32 %v405
        %v438 = vcvt.s32.f32 %v406
        %v439 = vcvt.s32.f32 %v407
        %v440 = vcvt.s32.f32 %v408
        %v441 = vcvt.s32.f32 %v409
        %v442 = vcvt.s32.f32 %v410
        %v443 = vcvt.s32.f32 %v411
        %v444 = vcvt.s32.f32 %v412
        %v445 = vcvt.s32.f32 %v413
        %v446 = vcvt.s32.f32 %v414
        %v447 = vcvt.s32.f32 %v415
        %v448 = vcvt.s32.f32 %v416
        %v449 = vcvt.s32.f32 %v417
        %v450 = vcvt.s32.f32 %v418
        %v451 = vcvt.s32.f32 %v419
        %v452 = vcvt.s32.f32 %v420
        %v453 = vcvt.s32.f32 %v421
        %v454 = vcvt.s32.f32 %v422
        %v455 = vcvt.s32.f32 %v423
        %v456 = vcvt.s32.f32 %v424
        %v457 = vcvt.s32.f32 %v425
        %v458 = vcvt.s32.f32 %v426
        %v459 = vcvt.s32.f32 %v427
        %v460 = vcvt.s32.f32 %v428
        %v461 = vcvt.s32.f32 %v429
        %v462 = vcvt.s32.f32 %v430
        %v463 = vcvt.s32.f32 %v431
        %v464 = vcvt.s32.f32 %v432
        %v465 = vpack.c.bf16 %v435, %v433
        %v466 = vpack.c.bf16 %v436, %v434
        %v467 = vpack.c.bf16 %v439, %v437
        %v468 = vpack.c.bf16 %v440, %v438
        %v469 = vpack.c.bf16 %v443, %v441
        %v470 = vpack.c.bf16 %v444, %v442
        %v471 = vpack.c.bf16 %v447, %v445
        %v472 = vpack.c.bf16 %v448, %v446
        %v473 = vpack.c.bf16 %v451, %v449
        %v474 = vpack.c.bf16 %v452, %v450
        %v475 = vpack.c.bf16 %v455, %v453
        %v476 = vpack.c.bf16 %v456, %v454
        %v477 = vpack.c.bf16 %v459, %v457
        %v478 = vpack.c.bf16 %v460, %v458
        %v479 = vpack.c.bf16 %v463, %v461
        %v480 = vpack.c.bf16 %v464, %v462
        %v481 = vlaneseq
        %v482 = vshrl.u32 %v481, 7
        %v483 = vsub.s32 0, %v482
        %v484 = vrot.slane %v343, %v483
        %v485 = vlaneseq
        %v486 = vshrl.u32 %v485, 7
        %v487 = vsub.s32 1, %v486
        %v488 = vrot.slane %v343, %v487
        %vm489 = vcmp.eq.s32.totalorder %v345, %v484
        %vm490 = vcmp.eq.s32.totalorder %v345, %v488
        %vm491 = vcmp.eq.s32.totalorder %v346, %v484
        %vm492 = vcmp.eq.s32.totalorder %v346, %v488
        %vm493 = vcmp.eq.s32.totalorder %v347, %v484
        %vm494 = vcmp.eq.s32.totalorder %v347, %v488
        %vm495 = vcmp.eq.s32.totalorder %v348, %v484
        %vm496 = vcmp.eq.s32.totalorder %v348, %v488
        %vm497 = vcmp.eq.s32.totalorder %v349, %v484
        %vm498 = vcmp.eq.s32.totalorder %v349, %v488
        %vm499 = vcmp.eq.s32.totalorder %v350, %v484
        %vm500 = vcmp.eq.s32.totalorder %v350, %v488
        %vm501 = vcmp.eq.s32.totalorder %v351, %v484
        %vm502 = vcmp.eq.s32.totalorder %v351, %v488
        %vm503 = vcmp.eq.s32.totalorder %v352, %v484
        %vm504 = vcmp.eq.s32.totalorder %v352, %v488
        %vm505 = vcmp.eq.s32.totalorder %v353, %v484
        %vm506 = vcmp.eq.s32.totalorder %v353, %v488
        %vm507 = vcmp.eq.s32.totalorder %v354, %v484
        %vm508 = vcmp.eq.s32.totalorder %v354, %v488
        %vm509 = vcmp.eq.s32.totalorder %v355, %v484
        %vm510 = vcmp.eq.s32.totalorder %v355, %v488
        %vm511 = vcmp.eq.s32.totalorder %v356, %v484
        %vm512 = vcmp.eq.s32.totalorder %v356, %v488
        %vm513 = vcmp.eq.s32.totalorder %v357, %v484
        %vm514 = vcmp.eq.s32.totalorder %v357, %v488
        %vm515 = vcmp.eq.s32.totalorder %v358, %v484
        %vm516 = vcmp.eq.s32.totalorder %v358, %v488
        %vm517 = vcmp.eq.s32.totalorder %v359, %v484
        %vm518 = vcmp.eq.s32.totalorder %v359, %v488
        %vm519 = vcmp.eq.s32.totalorder %v360, %v484
        %vm520 = vcmp.eq.s32.totalorder %v360, %v488
        %v521 = vsel %vm489, 1, 0
        %v522 = vsel %vm490, 1, 0
        %v523 = vsel %vm491, 1, 0
        %v524 = vsel %vm492, 1, 0
        %v525 = vsel %vm493, 1, 0
        %v526 = vsel %vm494, 1, 0
        %v527 = vsel %vm495, 1, 0
        %v528 = vsel %vm496, 1, 0
        %v529 = vsel %vm497, 1, 0
        %v530 = vsel %vm498, 1, 0
        %v531 = vsel %vm499, 1, 0
        %v532 = vsel %vm500, 1, 0
        %v533 = vsel %vm501, 1, 0
        %v534 = vsel %vm502, 1, 0
        %v535 = vsel %vm503, 1, 0
        %v536 = vsel %vm504, 1, 0
        %v537 = vsel %vm505, 1, 0
        %v538 = vsel %vm506, 1, 0
        %v539 = vsel %vm507, 1, 0
        %v540 = vsel %vm508, 1, 0
        %v541 = vsel %vm509, 1, 0
        %v542 = vsel %vm510, 1, 0
        %v543 = vsel %vm511, 1, 0
        %v544 = vsel %vm512, 1, 0
        %v545 = vsel %vm513, 1, 0
        %v546 = vsel %vm514, 1, 0
        %v547 = vsel %vm515, 1, 0
        %v548 = vsel %vm516, 1, 0
        %v549 = vsel %vm517, 1, 0
        %v550 = vsel %vm518, 1, 0
        %v551 = vsel %vm519, 1, 0
        %v552 = vsel %vm520, 1, 0
        %v553 = vcvt.s32.f32 %v521
        %v554 = vcvt.s32.f32 %v522
        %v555 = vcvt.s32.f32 %v523
        %v556 = vcvt.s32.f32 %v524
        %v557 = vcvt.s32.f32 %v525
        %v558 = vcvt.s32.f32 %v526
        %v559 = vcvt.s32.f32 %v527
        %v560 = vcvt.s32.f32 %v528
        %v561 = vcvt.s32.f32 %v529
        %v562 = vcvt.s32.f32 %v530
        %v563 = vcvt.s32.f32 %v531
        %v564 = vcvt.s32.f32 %v532
        %v565 = vcvt.s32.f32 %v533
        %v566 = vcvt.s32.f32 %v534
        %v567 = vcvt.s32.f32 %v535
        %v568 = vcvt.s32.f32 %v536
        %v569 = vcvt.s32.f32 %v537
        %v570 = vcvt.s32.f32 %v538
        %v571 = vcvt.s32.f32 %v539
        %v572 = vcvt.s32.f32 %v540
        %v573 = vcvt.s32.f32 %v541
        %v574 = vcvt.s32.f32 %v542
        %v575 = vcvt.s32.f32 %v543
        %v576 = vcvt.s32.f32 %v544
        %v577 = vcvt.s32.f32 %v545
        %v578 = vcvt.s32.f32 %v546
        %v579 = vcvt.s32.f32 %v547
        %v580 = vcvt.s32.f32 %v548
        %v581 = vcvt.s32.f32 %v549
        %v582 = vcvt.s32.f32 %v550
        %v583 = vcvt.s32.f32 %v551
        %v584 = vcvt.s32.f32 %v552
        %v585 = vpack.c.bf16 %v555, %v553
        %v586 = vpack.c.bf16 %v556, %v554
        %v587 = vpack.c.bf16 %v559, %v557
        %v588 = vpack.c.bf16 %v560, %v558
        %v589 = vpack.c.bf16 %v563, %v561
        %v590 = vpack.c.bf16 %v564, %v562
        %v591 = vpack.c.bf16 %v567, %v565
        %v592 = vpack.c.bf16 %v568, %v566
        %v593 = vpack.c.bf16 %v571, %v569
        %v594 = vpack.c.bf16 %v572, %v570
        %v595 = vpack.c.bf16 %v575, %v573
        %v596 = vpack.c.bf16 %v576, %v574
        %v597 = vpack.c.bf16 %v579, %v577
        %v598 = vpack.c.bf16 %v580, %v578
        %v599 = vpack.c.bf16 %v583, %v581
        %v600 = vpack.c.bf16 %v584, %v582
        %601 = vmatprep.subr.bf16.mxu0 %v586
        %602 = vmatpush1.bf16.xpose.msra.mxu0 %v585
        %603 = vmatprep.subr.bf16.mxu0 %v588
        %604 = vmatpush1.bf16.xpose.msra.mxu0 %v587
        %605 = vmatprep.subr.bf16.mxu0 %v590
        %606 = vmatpush1.bf16.xpose.msra.mxu0 %v589
        %607 = vmatprep.subr.bf16.mxu0 %v592
        %608 = vmatpush1.bf16.xpose.msra.mxu0 %v591
        %609 = vmatprep.subr.bf16.mxu0 %v594
        %610 = vmatpush1.bf16.xpose.msra.mxu0 %v593
        %611 = vmatprep.subr.bf16.mxu0 %v596
        %612 = vmatpush1.bf16.xpose.msra.mxu0 %v595
        %613 = vmatprep.subr.bf16.mxu0 %v598
        %614 = vmatpush1.bf16.xpose.msra.mxu0 %v597
        %615 = vmatprep.subr.bf16.mxu0 %v600
        %616 = vmatpush1.bf16.xpose.msra.mxu0 %v599
        %617 = vmatprep.subr.bf16.mxu0 0
        %618 = vmatpush1.bf16.xpose.msra.mxu0 0
        %619 = vmatprep.subr.bf16.mxu0 0
        %620 = vmatpush1.bf16.xpose.msra.mxu0 0
        %621 = vmatprep.subr.bf16.mxu0 0
        %622 = vmatpush1.bf16.xpose.msra.mxu0 0
        %623 = vmatprep.subr.bf16.mxu0 0
        %624 = vmatpush1.bf16.xpose.msra.mxu0 0
        %625 = vmatprep.subr.bf16.mxu0 0
        %626 = vmatpush1.bf16.xpose.msra.mxu0 0
        %627 = vmatprep.subr.bf16.mxu0 0
        %628 = vmatpush1.bf16.xpose.msra.mxu0 0
        %629 = vmatprep.subr.bf16.mxu0 0
        %630 = vmatpush1.bf16.xpose.msra.mxu0 0
        %631 = vmatprep.subr.bf16.mxu0 0
        %632 = vmatpush1.bf16.xpose.msra.mxu0 0
        %633 = vmatprep.mubr.bf16.mxu0 %v466
        %634 = vmatmul.mubr.bf16.gmra.mrb[0].mxu0 %v465
        %v635 = vpop.f32.mrb[0].mxu0
        %v636 = vadd.f32 0.0, %v635
        %v637 = vpop.f32.mrb[0].mxu0
        %v638 = vpop.f32.mrb[0].mxu0
        %v639 = vadd.f32 0.0, %v638
        %v640 = vpop.f32.mrb[0].mxu0
        %641 = vmatprep.mubr.bf16.mxu0 %v468
        %642 = vmatmul.mubr.bf16.gmra.mrb[0].mxu0 %v467
        %v643 = vpop.f32.mrb[0].mxu0
        %v644 = vadd.f32 0.0, %v643
        %v645 = vpop.f32.mrb[0].mxu0
        %v646 = vpop.f32.mrb[0].mxu0
        %v647 = vadd.f32 0.0, %v646
        %v648 = vpop.f32.mrb[0].mxu0
        %649 = vmatprep.mubr.bf16.mxu0 %v470
        %650 = vmatmul.mubr.bf16.gmra.mrb[0].mxu0 %v469
        %v651 = vpop.f32.mrb[0].mxu0
        %v652 = vadd.f32 0.0, %v651
        %v653 = vpop.f32.mrb[0].mxu0
        %v654 = vpop.f32.mrb[0].mxu0
        %v655 = vadd.f32 0.0, %v654
        %v656 = vpop.f32.mrb[0].mxu0
        %657 = vmatprep.mubr.bf16.mxu0 %v472
        %658 = vmatmul.mubr.bf16.gmra.mrb[0].mxu0 %v471
        %v659 = vpop.f32.mrb[0].mxu0
        %v660 = vadd.f32 0.0, %v659
        %v661 = vpop.f32.mrb[0].mxu0
        %v662 = vpop.f32.mrb[0].mxu0
        %v663 = vadd.f32 0.0, %v662
        %v664 = vpop.f32.mrb[0].mxu0
        %665 = vmatprep.mubr.bf16.mxu0 %v474
        %666 = vmatmul.mubr.bf16.gmra.mrb[0].mxu0 %v473
        %v667 = vpop.f32.mrb[0].mxu0
        %v668 = vadd.f32 0.0, %v667
        %v669 = vpop.f32.mrb[0].mxu0
        %v670 = vpop.f32.mrb[0].mxu0
        %v671 = vadd.f32 0.0, %v670
        %v672 = vpop.f32.mrb[0].mxu0
        %673 = vmatprep.mubr.bf16.mxu0 %v476
        %674 = vmatmul.mubr.bf16.gmra.mrb[0].mxu0 %v475
        %v675 = vpop.f32.mrb[0].mxu0
        %v676 = vadd.f32 0.0, %v675
        %v677 = vpop.f32.mrb[0].mxu0
        %v678 = vpop.f32.mrb[0].mxu0
        %v679 = vadd.f32 0.0, %v678
        %v680 = vpop.f32.mrb[0].mxu0
        %681 = vmatprep.mubr.bf16.mxu0 %v478
        %682 = vmatmul.mubr.bf16.gmra.mrb[0].mxu0 %v477
        %v683 = vpop.f32.mrb[0].mxu0
        %v684 = vadd.f32 0.0, %v683
        %v685 = vpop.f32.mrb[0].mxu0
        %v686 = vpop.f32.mrb[0].mxu0
        %v687 = vadd.f32 0.0, %v686
        %v688 = vpop.f32.mrb[0].mxu0
        %689 = vmatprep.mubr.bf16.mxu0 %v480
        %690 = vmatmul.mubr.bf16.gmra.mrb[0].mxu0 %v479
        %v691 = vpop.f32.mrb[0].mxu0
        %v692 = vadd.f32 0.0, %v691
        %v693 = vpop.f32.mrb[0].mxu0
        %v694 = vpop.f32.mrb[0].mxu0
        %v695 = vadd.f32 0.0, %v694
        %v696 = vpop.f32.mrb[0].mxu0
        %697 = vdwg.mxu0
        %v698 = vld [vmem:[%s264] sm:$0xff]
        %v699 = vld [vmem:[%s264 + $0x8] sm:$0xff]
        %v700 = vld [vmem:[%s264 + $0x10] sm:$0xff]
        %v701 = vld [vmem:[%s264 + $0x18] sm:$0xff]
        %v702 = vld [vmem:[%s264 + $0x20] sm:$0xff]
        %v703 = vld [vmem:[%s264 + $0x28] sm:$0xff]
        %v704 = vld [vmem:[%s264 + $0x30] sm:$0xff]
        %v705 = vld [vmem:[%s264 + $0x38] sm:$0xff]
        %v706 = vld [vmem:[%s264 + $0x40] sm:$0xff]
        %v707 = vld [vmem:[%s264 + $0x48] sm:$0xff]
        %v708 = vld [vmem:[%s264 + $0x50] sm:$0xff]
        %v709 = vld [vmem:[%s264 + $0x58] sm:$0xff]
        %v710 = vld [vmem:[%s264 + $0x60] sm:$0xff]
        %v711 = vld [vmem:[%s264 + $0x68] sm:$0xff]
        %v712 = vld [vmem:[%s264 + $0x70] sm:$0xff]
        %v713 = vld [vmem:[%s264 + $0x78] sm:$0xff]
        %v714 = vadd.f32 %v698, %v636
        %v715 = vadd.f32 %v699, %v639
        %v716 = vadd.f32 %v700, %v644
        %v717 = vadd.f32 %v701, %v647
        %v718 = vadd.f32 %v702, %v652
        %v719 = vadd.f32 %v703, %v655
        %v720 = vadd.f32 %v704, %v660
        %v721 = vadd.f32 %v705, %v663
        %v722 = vadd.f32 %v706, %v668
        %v723 = vadd.f32 %v707, %v671
        %v724 = vadd.f32 %v708, %v676
        %v725 = vadd.f32 %v709, %v679
        %v726 = vadd.f32 %v710, %v684
        %v727 = vadd.f32 %v711, %v687
        %v728 = vadd.f32 %v712, %v692
        %v729 = vadd.f32 %v713, %v695
        %730 = vst [vmem:[%s264] sm:$0xff] %v714
        %731 = vst [vmem:[%s264 + $0x8] sm:$0xff] %v715
        %732 = vst [vmem:[%s264 + $0x10] sm:$0xff] %v716
        %733 = vst [vmem:[%s264 + $0x18] sm:$0xff] %v717
        %734 = vst [vmem:[%s264 + $0x20] sm:$0xff] %v718
        %735 = vst [vmem:[%s264 + $0x28] sm:$0xff] %v719
        %736 = vst [vmem:[%s264 + $0x30] sm:$0xff] %v720
        %737 = vst [vmem:[%s264 + $0x38] sm:$0xff] %v721
        %738 = vst [vmem:[%s264 + $0x40] sm:$0xff] %v722
        %739 = vst [vmem:[%s264 + $0x48] sm:$0xff] %v723
        %740 = vst [vmem:[%s264 + $0x50] sm:$0xff] %v724
        %741 = vst [vmem:[%s264 + $0x58] sm:$0xff] %v725
        %742 = vst [vmem:[%s264 + $0x60] sm:$0xff] %v726
        %743 = vst [vmem:[%s264 + $0x68] sm:$0xff] %v727
        %744 = vst [vmem:[%s264 + $0x70] sm:$0xff] %v728
        %745 = vst [vmem:[%s264 + $0x78] sm:$0xff] %v729
        %v746 = vld [vmem:[%s282] sm:$0x1]
        %vm747 = vcmask 1040384
        %v748 = vsel %vm747, %v327, 2147483648
        %v749 = vsel %vm747, %v328, 2147483648
        %vm750 = vcmp.gt.s32.totalorder %v748, %v749
        %v751 = vsel %vm750, %v748, %v749
        %v752 = vand.u32 %v751, 65535
        %v753 = vshra.s32 %v751, 16
        %v754 = vcvt.s32.f32 %v752
        %v755 = vcvt.s32.f32 %v753
        %756 = vmax.xlane.f32.xlu0 %v755
        %v757 = vpop.xlane.xlu0 %756
        %vm758 = vcmp.eq.f32.partialorder %v755, %v757
        %v759 = vsel %vm758, %v754, -inf
        %760 = vmax.xlane.f32.xlu0 %v759
        %v761 = vpop.xlane.xlu0 %760
        %v762 = vcvt.f32.s32 %v761
        %v763 = vcvt.f32.s32 %v757
        %v764 = vshll.u32 %v763, 16
        %v765 = vadd.s32 %v764, %v762
        %vm766 = vcmp.gt.s32.totalorder %v746, %v765
        %v767 = vsel %vm766, %v746, %v765
        %vm768 = vcmask 0
        %769 = vst.msk [vmem:[%s282] sm:$0x1] %vm768, %v767
        %s770 = sand.u32 %s115, 1
        %s771 = scalar_lea.sflag [#allocation6], %s770
        %s772 = sand.u32 %s115, 1
        %s773 = smul.addr %s772, 128
        %s774 = scalar_lea.vmem [#allocation9], %s773
        %p775 = scmp.lt.s32.totalorder %s31, 1
        %s776 = scalar_select %p775, %s31, 1
        %p777 = scmp.lt.s32.totalorder %s32, 0
        %s778 = scalar_select %p777, %s32, 0
        %s779 = sadd.s32 %s778, %s776
        %s780 = scalar_lea.vmem %s4, %s779
        // Predicated region
        $region41: #{tpu_custom_call.1} parent=27 // pred_check
          %p781 = pneg %p125
        $region42: #{tpu_custom_call.1} parent=27 // pred_check_branch
          %783 = sbr.rel (%p781) target = $region44
        $region43: #{tpu_custom_call.1} parent=27 // pred_region
          %s785 = ssub.s32 2048, 2048
          %786 = vsyncadd %s771, %s785
          %s787 = smul.addr %s32, 16
          %s788 = smul.addr %s31, 16
          %s789 = sadd.s32 %s787, %s788
          %s790 = smul.addr %s789, 128
          %s791 = scalar_lea.hbm %s3, %s790
          %s792 = sshll.u32 %s774, 4
          %s793 = int_to_ptr.vmem [resolvable:$true] %s792
          %798 = dma.vmem_to_hbm [thread:$0]  %s793, 2048, %s791, %s771, 128, 128, 8
        $region44: #{tpu_custom_call.1} parent=27 // pred_fallthru
          _
        // Predicated region
        $region45: #{tpu_custom_call.1} parent=27 // pred_check
          %p799 = pneg %p153
        $region46: #{tpu_custom_call.1} parent=27 // pred_check_branch
          %801 = sbr.rel (%p799) target = $region48
        $region47: #{tpu_custom_call.1} parent=27 // pred_region
          _
        $region48: #{tpu_custom_call.1} parent=27 // pred_fallthru
          _
      $region28: #{tpu_custom_call.1} parent=5 // pred_fallthru
        _
      %p802 = scmp.le.s32.totalorder 2, %s21
      // Predicated region
      $region49: #{tpu_custom_call.1} parent=5 // pred_check
        %p803 = pneg %p802
      $region50: #{tpu_custom_call.1} parent=5 // pred_check_branch
        %805 = sbr.rel (%p803) target = $region52
      $region51: #{tpu_custom_call.1} parent=5 // pred_region
        %s806 = ssub.s32 %s21, 2
        // Predicated region
        $region53: #{tpu_custom_call.1} parent=51 // pred_check
          %p807 = pneg %p131
        $region54: #{tpu_custom_call.1} parent=51 // pred_check_branch
          %809 = sbr.rel (%p807) target = $region56
        $region55: #{tpu_custom_call.1} parent=51 // pred_region
          %s810 = sand.u32 %s116, 1
          %s811 = scalar_lea.sflag [#allocation6], %s810
          %s812 = sand.u32 %s116, 1
          %s813 = smul.addr %s812, 128
          %s814 = scalar_lea.vmem [#allocation9], %s813
          %815 = dma.done %s811, 2048
        $region56: #{tpu_custom_call.1} parent=51 // pred_fallthru
          _
        // Predicated region
        $region57: #{tpu_custom_call.1} parent=51 // pred_check
          %p816 = pneg %p159
        $region58: #{tpu_custom_call.1} parent=51 // pred_check_branch
          %818 = sbr.rel (%p816) target = $region60
        $region59: #{tpu_custom_call.1} parent=51 // pred_region
          %p819 = scmp.lt.s32.totalorder %s34, 1
          %s820 = scalar_select %p819, %s34, 1
          %p821 = scmp.lt.s32.totalorder %s35, 0
          %s822 = scalar_select %p821, %s35, 0
          %s823 = sadd.s32 %s822, %s820
          %s824 = scalar_lea.vmem %s4, %s823
        $region60: #{tpu_custom_call.1} parent=51 // pred_fallthru
          _
      $region52: #{tpu_custom_call.1} parent=5 // pred_fallthru
        _
    $region6: #{tpu_custom_call.1} parent=1 // loop_footer
      %s25 = sadd.s32 1, %s21
    $region7: #{tpu_custom_call.1} parent=1 // loop_footer_branch
      %20 = sbr.rel target = $region3
    $region8: #{tpu_custom_call.1} parent=1 // loop_exit
      _
    %825 = vsyncpa [#allocation5], 1
    %s826 = scalar_lea.sflag [#allocation5], 1
    %827 = vsyncpa %s826, 1
    %828 = vsyncpa [#allocation8], 1
    %s829 = scalar_lea.sflag [#allocation8], 1
    %830 = vsyncpa %s829, 1
    %831 = vsyncpa [#allocation6], 1
    %s832 = scalar_lea.sflag [#allocation6], 1
    %833 = vsyncpa %s832, 1

</llo_original>
